<compile_context>
chip_gen: v5e
topology: v5e:2x2
jax: 0.10.0
libtpu: 0.0.40
codegen_flags: <defaults>
</compile_context>

<pallas_src>
import functools
import math

import jax
import jax.numpy as jnp
from jax.experimental import pallas as pl
from jax.experimental.pallas import tpu as pltpu

N_EMB = 384        # n_emb in the reference module
HEAD_SIZE = 16     # head_size in the reference module
BLOCK_SIZE = 256   # max sequence length (size of the registered tril buffer)
DROPOUT_P = 0.2

NEG_INF = float("-inf")


def _head_kernel(scale, train, x_ref, wq_ref, wk_ref, wv_ref, *rest):
    if train:
        keep_ref, o_ref = rest
    else:
        (o_ref,) = rest

    x = x_ref[0]                                              # (T, C) f32

    # q / k / v projections on the MXU with f32 accumulation.
    q = jnp.dot(x, wq_ref[...], preferred_element_type=jnp.float32)   # (T, hs)
    k = jnp.dot(x, wk_ref[...], preferred_element_type=jnp.float32)   # (T, hs)
    v = jnp.dot(x, wv_ref[...], preferred_element_type=jnp.float32)   # (T, hs)

    # Attention scores, scaled by C**-0.5 (C == n_emb, matching the module).
    s = jnp.dot(q, k.T, preferred_element_type=jnp.float32) * scale   # (T, T)

    # Causal (tril) mask: query t may only attend to keys <= t.
    T = s.shape[0]
    row = jax.lax.broadcasted_iota(jnp.int32, (T, T), 0)
    col = jax.lax.broadcasted_iota(jnp.int32, (T, T), 1)
    s = jnp.where(row >= col, s, NEG_INF)

    # Softmax along the key axis (diagonal is always unmasked -> rows are finite).
    m = jnp.max(s, axis=-1, keepdims=True)
    p = jnp.exp(s - m)
    p = p / jnp.sum(p, axis=-1, keepdims=True)

    if train:
        # Dropout(0.2) on the attention weights; keep mask is pre-scaled by 1/(1-p).
        p = p * keep_ref[0]

    o = jnp.dot(p, v, preferred_element_type=jnp.float32)             # (T, hs)
    o_ref[0] = o.astype(o_ref.dtype)


def head_attention(x, wq, wk, wv, *, train=False, dropout_key=None):
    """x: (B, T, C); wq/wk/wv: (C, head_size). Returns (B, T, head_size)."""
    B, T, C = x.shape
    hs = wq.shape[1]
    assert T <= BLOCK_SIZE, "sequence length exceeds the module's block_size"
    scale = 1.0 / math.sqrt(C)

    kernel = functools.partial(_head_kernel, scale, train)

    in_specs = [
        pl.BlockSpec((1, T, C), lambda b: (b, 0, 0)),   # x tile for this batch row
        pl.BlockSpec((C, hs), lambda b: (0, 0)),        # Wq (VMEM-resident)
        pl.BlockSpec((C, hs), lambda b: (0, 0)),        # Wk (VMEM-resident)
        pl.BlockSpec((C, hs), lambda b: (0, 0)),        # Wv (VMEM-resident)
    ]
    args = [x, wq, wk, wv]

    if train:
        if dropout_key is None:
            dropout_key = jax.random.PRNGKey(0)
        keep = jax.random.bernoulli(dropout_key, 1.0 - DROPOUT_P, (B, T, T))
        keep = keep.astype(jnp.float32) / (1.0 - DROPOUT_P)
        in_specs.append(pl.BlockSpec((1, T, T), lambda b: (b, 0, 0)))
        args.append(keep)

    # Advisory cost estimate: 3 projections + q@k^T + p@v, plus the softmax exps.
    flops = B * (3 * 2 * T * C * hs + 2 * T * T * hs + 2 * T * T * hs)
    bytes_accessed = 4 * (x.size + wq.size + wk.size + wv.size + B * T * hs)
    cost = pl.CostEstimate(flops=int(flops),
                           transcendentals=int(B * T * T),
                           bytes_accessed=int(bytes_accessed))

    out = pl.pallas_call(
        kernel,
        out_shape=jax.ShapeDtypeStruct((B, T, hs), x.dtype),
        grid=(B,),
        in_specs=in_specs,
        out_specs=pl.BlockSpec((1, T, hs), lambda b: (b, 0, 0)),
        compiler_params=pltpu.CompilerParams(
            dimension_semantics=("parallel",),       # batch rows independent -> both TCs on v7x
            vmem_limit_bytes=32 * 1024 * 1024,       # explicit budget; usage here is tiny
        ),
        cost_estimate=cost,
    )(*args)
    return out


def _init_params(key, n_emb, head_size):
    """Mirror nn.Linear(bias=False) default init: U(-1/sqrt(fan_in), +1/sqrt(fan_in))."""
    kq, kk, kv = jax.random.split(key, 3)
    lim = 1.0 / math.sqrt(n_emb)
    wq = jax.random.uniform(kq, (n_emb, head_size), jnp.float32, -lim, lim)
    wk = jax.random.uniform(kk, (n_emb, head_size), jnp.float32, -lim, lim)
    wv = jax.random.uniform(kv, (n_emb, head_size), jnp.float32, -lim, lim)
    return wq, wk, wv


if __name__ == "__main__":
    # Small shapes consistent with the module: (B, T, C) with C = n_emb = 384.
    B, T = 2, 8
    C, hs = N_EMB, HEAD_SIZE

    key = jax.random.PRNGKey(0)
    kx, kp, kd = jax.random.split(key, 3)
    x = jax.random.normal(kx, (B, T, C), dtype=jnp.float32)
    wq, wk, wv = _init_params(kp, C, hs)

    # Eval-mode forward (Dropout is identity), matching module.eval().
    out = jax.block_until_ready(head_attention(x, wq, wk, wv, train=False))
    assert out.shape == (B, T, hs)

    # Pure-JAX reference for correctness.
    hp = jax.lax.Precision.HIGHEST
    q = jnp.einsum("btc,ch->bth", x, wq, precision=hp)
    k = jnp.einsum("btc,ch->bth", x, wk, precision=hp)
    v = jnp.einsum("btc,ch->bth", x, wv, precision=hp)
    s = jnp.einsum("bqh,bkh->bqk", q, k, precision=hp) * (C ** -0.5)
    causal = jnp.tril(jnp.ones((T, T), dtype=bool))
    s = jnp.where(causal[None, :, :], s, -jnp.inf)
    p = jax.nn.softmax(s, axis=-1)
    ref = jnp.einsum("bqk,bkh->bqh", p, v, precision=hp)
    err = float(jnp.max(jnp.abs(out - ref)))
    assert jnp.allclose(out, ref, atol=1e-2, rtol=1e-2), f"mismatch vs reference, max|err|={err}"

    # Training-mode forward (dropout on attention weights): check it runs and is finite.
    out_tr = jax.block_until_ready(
        head_attention(x, wq, wk, wv, train=True, dropout_key=kd))
    assert out_tr.shape == (B, T, hs)
    assert bool(jnp.all(jnp.isfinite(out_tr)))

    print("KERNEL_OK")
</pallas_src>

<mosaic_0001>
module attributes {stable_mosaic.version = 11 : i64} {
  func.func @_head_kernel(%arg0: i32, %arg1: memref<1x8x384xf32, #tpu.memory_space<vmem>>, %arg2: memref<384x16xf32, #tpu.memory_space<vmem>>, %arg3: memref<384x16xf32, #tpu.memory_space<vmem>>, %arg4: memref<384x16xf32, #tpu.memory_space<vmem>>, %arg5: memref<1x8x16xf32, #tpu.memory_space<vmem>>) attributes {dimension_semantics = [#tpu.dimension_semantics<parallel>], iteration_bounds = array<i64: 2>, scalar_prefetch = 0 : i64, scratch_operands = 0 : i64, tpu.core_type = #tpu.core_type<tc>, window_params = [{transform_indices = @transform_0, window_bounds = array<i64: 1, 8, 384>}, {pipeline_mode = #tpu.pipeline_mode<synchronous>, transform_indices = @transform_1, window_bounds = array<i64: 384, 16>}, {pipeline_mode = #tpu.pipeline_mode<synchronous>, transform_indices = @transform_2, window_bounds = array<i64: 384, 16>}, {pipeline_mode = #tpu.pipeline_mode<synchronous>, transform_indices = @transform_3, window_bounds = array<i64: 384, 16>}, {transform_indices = @transform_4, window_bounds = array<i64: 1, 8, 16>}]} {
    %c0 = arith.constant 0 : index
    %c0_0 = arith.constant 0 : index
    %c0_1 = arith.constant 0 : index
    %0 = vector.load %arg1[%c0, %c0_0, %c0_1] : memref<1x8x384xf32, #tpu.memory_space<vmem>>, vector<1x8x384xf32>
    %1 = vector.shape_cast %0 : vector<1x8x384xf32> to vector<8x384xf32>
    %c0_2 = arith.constant 0 : index
    %c0_3 = arith.constant 0 : index
    %2 = vector.load %arg2[%c0_2, %c0_3] : memref<384x16xf32, #tpu.memory_space<vmem>>, vector<384x16xf32>
    %cst = arith.constant dense<0.000000e+00> : vector<8x16xf32>
    %3 = tpu.matmul %1, %2, %cst {dimension_numbers = #tpu.dot_dimension_numbers<[1], [0], [0], [1], [0, 0, 1, 1], [], []>} : vector<8x384xf32>, vector<384x16xf32>, vector<8x16xf32> -> vector<8x16xf32>
    %c0_4 = arith.constant 0 : index
    %c0_5 = arith.constant 0 : index
    %4 = vector.load %arg3[%c0_4, %c0_5] : memref<384x16xf32, #tpu.memory_space<vmem>>, vector<384x16xf32>
    %cst_6 = arith.constant dense<0.000000e+00> : vector<8x16xf32>
    %5 = tpu.matmul %1, %4, %cst_6 {dimension_numbers = #tpu.dot_dimension_numbers<[1], [0], [0], [1], [0, 0, 1, 1], [], []>} : vector<8x384xf32>, vector<384x16xf32>, vector<8x16xf32> -> vector<8x16xf32>
    %c0_7 = arith.constant 0 : index
    %c0_8 = arith.constant 0 : index
    %6 = vector.load %arg4[%c0_7, %c0_8] : memref<384x16xf32, #tpu.memory_space<vmem>>, vector<384x16xf32>
    %cst_9 = arith.constant dense<0.000000e+00> : vector<8x16xf32>
    %7 = tpu.matmul %1, %6, %cst_9 {dimension_numbers = #tpu.dot_dimension_numbers<[1], [0], [0], [1], [0, 0, 1, 1], [], []>} : vector<8x384xf32>, vector<384x16xf32>, vector<8x16xf32> -> vector<8x16xf32>
    %8 = tpu.transpose %5, [1, 0] : vector<8x16xf32> -> vector<16x8xf32>
    %cst_10 = arith.constant dense<0.000000e+00> : vector<8x8xf32>
    %9 = tpu.matmul %3, %8, %cst_10 {dimension_numbers = #tpu.dot_dimension_numbers<[1], [0], [0], [1], [0, 0, 1, 1], [], []>} : vector<8x16xf32>, vector<16x8xf32>, vector<8x8xf32> -> vector<8x8xf32>
    %cst_11 = arith.constant 0.0510310382 : f32
    %10 = vector.broadcast %cst_11 : f32 to vector<8x8xf32>
    %11 = arith.mulf %9, %10 : vector<8x8xf32>
    %12 = tpu.iota {dimensions = array<i32: 0>} : vector<8x8xi32>
    %13 = tpu.iota {dimensions = array<i32: 1>} : vector<8x8xi32>
    %14 = arith.cmpi sge, %12, %13 : vector<8x8xi32>
    %cst_12 = arith.constant 0xFF800000 : f32
    %15 = vector.broadcast %cst_12 : f32 to vector<8x8xf32>
    %16 = arith.select %14, %11, %15 : vector<8x8xi1>, vector<8x8xf32>
    %cst_13 = arith.constant dense<0xFF800000> : vector<8xf32>
    %17 = vector.multi_reduction <maximumf>, %16, %cst_13 [1] : vector<8x8xf32> to vector<8xf32>
    %18 = vector.shape_cast %17 : vector<8xf32> to vector<8x1xf32>
    %19 = vector.broadcast %18 : vector<8x1xf32> to vector<8x8xf32>
    %20 = arith.subf %16, %19 : vector<8x8xf32>
    %21 = math.exp %20 : vector<8x8xf32>
    %cst_14 = arith.constant dense<0.000000e+00> : vector<8xf32>
    %22 = vector.multi_reduction <add>, %21, %cst_14 [1] : vector<8x8xf32> to vector<8xf32>
    %23 = vector.shape_cast %22 : vector<8xf32> to vector<8x1xf32>
    %24 = vector.broadcast %23 : vector<8x1xf32> to vector<8x8xf32>
    %25 = arith.divf %21, %24 : vector<8x8xf32>
    %cst_15 = arith.constant dense<0.000000e+00> : vector<8x16xf32>
    %26 = tpu.matmul %25, %7, %cst_15 {dimension_numbers = #tpu.dot_dimension_numbers<[1], [0], [0], [1], [0, 0, 1, 1], [], []>} : vector<8x8xf32>, vector<8x16xf32>, vector<8x16xf32> -> vector<8x16xf32>
    %c0_16 = arith.constant 0 : index
    %c0_17 = arith.constant 0 : index
    %c0_18 = arith.constant 0 : index
    %27 = vector.load %arg5[%c0_16, %c0_17, %c0_18] : memref<1x8x16xf32, #tpu.memory_space<vmem>>, vector<1x8x16xf32>
    %28 = vector.shape_cast %27 : vector<1x8x16xf32> to vector<8x16xf32>
    %29 = vector.shape_cast %26 : vector<8x16xf32> to vector<1x8x16xf32>
    tpu.vector_store %arg5[%c0_16, %c0_17, %c0_18], %29 {strides = array<i32>} : memref<1x8x16xf32, #tpu.memory_space<vmem>>, vector<1x8x16xf32>,
    return
  }
  func.func @transform_0(%arg0: i32) -> (i32, i32, i32) {
    %c0_i32 = arith.constant 0 : i32
    %c0_i32_0 = arith.constant 0 : i32
    %c0_i32_1 = arith.constant 0 : i32
    return %arg0, %c0_i32, %c0_i32_0 : i32, i32, i32
  }
  func.func @transform_1(%arg0: i32) -> (i32, i32) {
    %c0_i32 = arith.constant 0 : i32
    %c0_i32_0 = arith.constant 0 : i32
    %c0_i32_1 = arith.constant 0 : i32
    return %c0_i32, %c0_i32_0 : i32, i32
  }
  func.func @transform_2(%arg0: i32) -> (i32, i32) {
    %c0_i32 = arith.constant 0 : i32
    %c0_i32_0 = arith.constant 0 : i32
    %c0_i32_1 = arith.constant 0 : i32
    return %c0_i32, %c0_i32_0 : i32, i32
  }
  func.func @transform_3(%arg0: i32) -> (i32, i32) {
    %c0_i32 = arith.constant 0 : i32
    %c0_i32_0 = arith.constant 0 : i32
    %c0_i32_1 = arith.constant 0 : i32
    return %c0_i32, %c0_i32_0 : i32, i32
  }
  func.func @transform_4(%arg0: i32) -> (i32, i32, i32) {
    %c0_i32 = arith.constant 0 : i32
    %c0_i32_0 = arith.constant 0 : i32
    %c0_i32_1 = arith.constant 0 : i32
    return %arg0, %c0_i32, %c0_i32_0 : i32, i32, i32
  }
}

</mosaic_0001>

<llo_original>
// kernel: tpu_custom_call.1
$region0: #{tpu_custom_call.1}
  #allocation0 [shape = 'u32[]', space=smem, size = 0x4, offset = 0x4, fixed_abs, tag = 'smem constant byte address 0x4 - core index']
  #allocation1 [shape = 'u32[72,128]{1,0:T(1,128)}', space=vmem, size = 0x9000, scoped, tag = 'internal scratch']
  %s0 = inlined_call_operand.vmem [shape: f32[2,8,384], index: 0, kind: input, shape index: {}]
  %s1 = inlined_call_operand.vmem [shape: f32[384,16], index: 1, kind: input, shape index: {}]
  %s2 = inlined_call_operand.vmem [shape: f32[384,16], index: 2, kind: input, shape index: {}]
  %s3 = inlined_call_operand.vmem [shape: f32[384,16], index: 3, kind: input, shape index: {}]
  %s4 = inlined_call_operand.hbm [shape: f32[2,8,16], index: 4, kind: output, shape index: {}]
  %s5 = sld [smem:[#allocation0]]
  $region49: #{tpu_custom_call.1} parent=0
    _
  %s7 = ssub.s32 1, %s5
  %s8 = scalar_select 0, %s7, %s5
  $region1: #{tpu_custom_call.1} parent=0
    #allocation2 [shape = 'u8[8192]{0}', space=vmem, size = 0x2000, scoped, tag = 'output window, operand 0']
    #allocation3 [shape = 's32[2]{0}', space=sflag, size = 0x8, scoped, tag = 'scoped memory for tpu_custom_call.1']
    %9 = vsyncpa [#allocation3], 0
    %s10 = scalar_lea.sflag [#allocation3], 1
    %11 = vsyncpa %s10, 0
    loop: start=0, step=1, limit=4
    $region2: #{tpu_custom_call.1} parent=1 // loop_pre_header
      _
    $region3: #{tpu_custom_call.1} parent=1 // loop_header
      %s13 = sphi 0, %s17
      %p14 = scmp.ge.s32.totalorder %s13, 4
      %s23 = sphi 0, %s25
      %s26 = sphi 0, %s23
      %s27 = sphi 0, %s26
      %s43 = sphi 0, %s27
      %s47 = sphi 0, %s47
      %s49 = sphi 0, %s47
      %s50 = sphi 0, %s49
      %s64 = sphi 0, %s50
      %s68 = sphi 0, %s68
      %s70 = sphi 0, %s68
      %s71 = sphi 0, %s70
      %s85 = sphi 0, %s71
      %s89 = sphi 0, %s89
      %s91 = sphi 0, %s89
      %s92 = sphi 0, %s91
      %s106 = sphi 0, %s92
      %s112 = sphi 0, %s114
      %s115 = sphi 0, %s112
      %s116 = sphi 0, %s115
      %s132 = sphi 0, %s116
    $region4: #{tpu_custom_call.1} parent=1 // loop_header_branch
      %16 = sbr.rel (%p14) target = $region8
    $region5: #{tpu_custom_call.1} parent=1 // loop_body
      %s18 = ssub.s32 %s13, 1
      %s19 = ssub.s32 %s13, 2
      %s20 = sadd.s32 %s13, 1
      %s21 = ssub.s32 %s13, %s20
      %p22 = scmp.eq.s32.totalorder %s21, 0
      %s24 = sadd.s32 %s23, 1
      %s25 = scalar_select %p22, %s23, %s24
      %p28 = pneg %p22
      %p29 = scmp.eq.s32.totalorder %s13, 1
      %p30 = por %p28, %p29
      %p31 = scmp.ne.s32.totalorder %s23, %s26
      %p32 = scmp.eq.s32.totalorder %s13, 0
      %p33 = por %p31, %p32
      %p34 = scmp.ne.s32.totalorder %s23, %s26
      %p35 = scmp.eq.s32.totalorder %s18, 1
      %p36 = por %p34, %p35
      %p37 = scmp.ne.s32.totalorder %s26, %s27
      %p38 = scmp.eq.s32.totalorder %s18, 0
      %p39 = por %p37, %p38
      %p40 = scmp.ne.s32.totalorder %s26, %s27
      %p41 = scmp.eq.s32.totalorder %s19, 1
      %p42 = por %p40, %p41
      %p44 = scmp.ne.s32.totalorder %s27, %s43
      %p45 = scmp.eq.s32.totalorder %s19, 0
      %p46 = por %p44, %p45
      %s48 = sadd.s32 %s47, 1
      %p51 = scmp.eq.s32.totalorder %s13, 1
      %p52 = scmp.ne.s32.totalorder %s47, %s49
      %p53 = scmp.eq.s32.totalorder %s13, 0
      %p54 = por %p52, %p53
      %p55 = scmp.ne.s32.totalorder %s47, %s49
      %p56 = scmp.eq.s32.totalorder %s18, 1
      %p57 = por %p55, %p56
      %p58 = scmp.ne.s32.totalorder %s49, %s50
      %p59 = scmp.eq.s32.totalorder %s18, 0
      %p60 = por %p58, %p59
      %p61 = scmp.ne.s32.totalorder %s49, %s50
      %p62 = scmp.eq.s32.totalorder %s19, 1
      %p63 = por %p61, %p62
      %p65 = scmp.ne.s32.totalorder %s50, %s64
      %p66 = scmp.eq.s32.totalorder %s19, 0
      %p67 = por %p65, %p66
      %s69 = sadd.s32 %s68, 1
      %p72 = scmp.eq.s32.totalorder %s13, 1
      %p73 = scmp.ne.s32.totalorder %s68, %s70
      %p74 = scmp.eq.s32.totalorder %s13, 0
      %p75 = por %p73, %p74
      %p76 = scmp.ne.s32.totalorder %s68, %s70
      %p77 = scmp.eq.s32.totalorder %s18, 1
      %p78 = por %p76, %p77
      %p79 = scmp.ne.s32.totalorder %s70, %s71
      %p80 = scmp.eq.s32.totalorder %s18, 0
      %p81 = por %p79, %p80
      %p82 = scmp.ne.s32.totalorder %s70, %s71
      %p83 = scmp.eq.s32.totalorder %s19, 1
      %p84 = por %p82, %p83
      %p86 = scmp.ne.s32.totalorder %s71, %s85
      %p87 = scmp.eq.s32.totalorder %s19, 0
      %p88 = por %p86, %p87
      %s90 = sadd.s32 %s89, 1
      %p93 = scmp.eq.s32.totalorder %s13, 1
      %p94 = scmp.ne.s32.totalorder %s89, %s91
      %p95 = scmp.eq.s32.totalorder %s13, 0
      %p96 = por %p94, %p95
      %p97 = scmp.ne.s32.totalorder %s89, %s91
      %p98 = scmp.eq.s32.totalorder %s18, 1
      %p99 = por %p97, %p98
      %p100 = scmp.ne.s32.totalorder %s91, %s92
      %p101 = scmp.eq.s32.totalorder %s18, 0
      %p102 = por %p100, %p101
      %p103 = scmp.ne.s32.totalorder %s91, %s92
      %p104 = scmp.eq.s32.totalorder %s19, 1
      %p105 = por %p103, %p104
      %p107 = scmp.ne.s32.totalorder %s92, %s106
      %p108 = scmp.eq.s32.totalorder %s19, 0
      %p109 = por %p107, %p108
      %s110 = ssub.s32 %s13, %s20
      %p111 = scmp.eq.s32.totalorder %s110, 0
      %s113 = sadd.s32 %s112, 1
      %s114 = scalar_select %p111, %s112, %s113
      %p117 = pneg %p111
      %p118 = scmp.eq.s32.totalorder %s13, 1
      %p119 = por %p117, %p118
      %p120 = scmp.ne.s32.totalorder %s112, %s115
      %p121 = scmp.eq.s32.totalorder %s13, 0
      %p122 = por %p120, %p121
      %p123 = scmp.ne.s32.totalorder %s112, %s115
      %p124 = scmp.eq.s32.totalorder %s18, 1
      %p125 = por %p123, %p124
      %p126 = scmp.ne.s32.totalorder %s115, %s116
      %p127 = scmp.eq.s32.totalorder %s18, 0
      %p128 = por %p126, %p127
      %p129 = scmp.ne.s32.totalorder %s115, %s116
      %p130 = scmp.eq.s32.totalorder %s19, 1
      %p131 = por %p129, %p130
      %p133 = scmp.ne.s32.totalorder %s116, %s132
      %p134 = scmp.eq.s32.totalorder %s19, 0
      %p135 = por %p133, %p134
      %p136 = scmp.le.s32.totalorder 1, %s13
      %p137 = scmp.lt.s32.totalorder %s13, 3
      %p138 = pnand %p136, %p137
      %p139 = pneg %p138
      // Predicated region
      $region9: #{tpu_custom_call.1} parent=5 // pred_check
        _
      $region10: #{tpu_custom_call.1} parent=5 // pred_check_branch
        %141 = sbr.rel (%p138) target = $region12
      $region11: #{tpu_custom_call.1} parent=5 // pred_region
        %s142 = ssub.s32 %s13, 1
        // Predicated region
        $region13: #{tpu_custom_call.1} parent=11 // pred_check
          %p143 = pneg %p60
        $region14: #{tpu_custom_call.1} parent=11 // pred_check_branch
          %145 = sbr.rel (%p143) target = $region16
        $region15: #{tpu_custom_call.1} parent=11 // pred_region
          _
        $region16: #{tpu_custom_call.1} parent=11 // pred_fallthru
          _
        // Predicated region
        $region17: #{tpu_custom_call.1} parent=11 // pred_check
          %p146 = pneg %p81
        $region18: #{tpu_custom_call.1} parent=11 // pred_check_branch
          %148 = sbr.rel (%p146) target = $region20
        $region19: #{tpu_custom_call.1} parent=11 // pred_region
          _
        $region20: #{tpu_custom_call.1} parent=11 // pred_fallthru
          _
        // Predicated region
        $region21: #{tpu_custom_call.1} parent=11 // pred_check
          %p149 = pneg %p102
        $region22: #{tpu_custom_call.1} parent=11 // pred_check_branch
          %151 = sbr.rel (%p149) target = $region24
        $region23: #{tpu_custom_call.1} parent=11 // pred_region
          _
        $region24: #{tpu_custom_call.1} parent=11 // pred_fallthru
          _
      $region12: #{tpu_custom_call.1} parent=5 // pred_fallthru
        _
      %p152 = scmp.lt.s32.totalorder %s13, 2
      // Predicated region
      $region25: #{tpu_custom_call.1} parent=5 // pred_check
        %p153 = pneg %p152
      $region26: #{tpu_custom_call.1} parent=5 // pred_check_branch
        %155 = sbr.rel (%p153) target = $region28
      $region27: #{tpu_custom_call.1} parent=5 // pred_region
        // Predicated region
        $region29: #{tpu_custom_call.1} parent=27 // pred_check
          %p156 = pneg %p33
        $region30: #{tpu_custom_call.1} parent=27 // pred_check_branch
          %158 = sbr.rel (%p156) target = $region32
        $region31: #{tpu_custom_call.1} parent=27 // pred_region
          %p159 = scmp.lt.s32.totalorder %s13, 1
          %s160 = scalar_select %p159, %s13, 1
          %s161 = smul.addr %s160, 3
          %s162 = smul.addr %s161, 8
          %s163 = scalar_lea.vmem %s0, %s162
        $region32: #{tpu_custom_call.1} parent=27 // pred_fallthru
          _
      $region28: #{tpu_custom_call.1} parent=5 // pred_fallthru
        _
      %p164 = scmp.le.s32.totalorder 1, %s13
      %p165 = scmp.lt.s32.totalorder %s13, 3
      %p166 = pnand %p164, %p165
      %p167 = pneg %p166
      // Predicated region
      $region33: #{tpu_custom_call.1} parent=5 // pred_check
        _
      $region34: #{tpu_custom_call.1} parent=5 // pred_check_branch
        %169 = sbr.rel (%p166) target = $region36
      $region35: #{tpu_custom_call.1} parent=5 // pred_region
        %s170 = ssub.s32 %s13, 1
        %p171 = scmp.lt.s32.totalorder %s18, 1
        %s172 = scalar_select %p171, %s18, 1
        %s173 = smul.addr %s172, 3
        %s174 = smul.addr %s173, 8
        %s175 = scalar_lea.vmem %s0, %s174
        %p176 = pneg %p39
        %p177 = pneg %p36
        %p178 = pneg %p60
        %p179 = pneg %p57
        %p180 = pneg %p81
        %p181 = pneg %p78
        %p182 = pneg %p102
        %p183 = pneg %p99
        %p184 = pneg %p128
        %p185 = pneg %p125
        %s186 = sand.u32 %s115, 1
        %s187 = scalar_lea.sflag [#allocation3], %s186
        %s188 = sand.u32 %s115, 1
        %s189 = smul.addr %s188, 8
        %s190 = scalar_lea.vmem [#allocation2], %s189
        %p191 = scmp.lt.s32.totalorder %s18, 1
        %s192 = scalar_select %p191, %s18, 1
        %s193 = smul.addr %s192, 3
        %s194 = smul.addr %s193, 8
        %s195 = scalar_lea.vmem %s0, %s194
        %v196 = vld [vmem:[%s195] sm:$0xff]
        %v197 = vld [vmem:[%s195 + $0x8] sm:$0xff]
        %v198 = vld [vmem:[%s195 + $0x10] sm:$0xff]
        %v199 = vld [vmem:[%s1] sm:$0xff]
        %v200 = vld [vmem:[%s1 + $0x8] sm:$0xff]
        %v201 = vld [vmem:[%s1 + $0x10] sm:$0xff]
        %v202 = vld [vmem:[%s1 + $0x18] sm:$0xff]
        %v203 = vld [vmem:[%s1 + $0x20] sm:$0xff]
        %v204 = vld [vmem:[%s1 + $0x28] sm:$0xff]
        %v205 = vld [vmem:[%s1 + $0x30] sm:$0xff]
        %v206 = vld [vmem:[%s1 + $0x38] sm:$0xff]
        %v207 = vld [vmem:[%s1 + $0x40] sm:$0xff]
        %v208 = vld [vmem:[%s1 + $0x48] sm:$0xff]
        %v209 = vld [vmem:[%s1 + $0x50] sm:$0xff]
        %v210 = vld [vmem:[%s1 + $0x58] sm:$0xff]
        %v211 = vld [vmem:[%s1 + $0x60] sm:$0xff]
        %v212 = vld [vmem:[%s1 + $0x68] sm:$0xff]
        %v213 = vld [vmem:[%s1 + $0x70] sm:$0xff]
        %v214 = vld [vmem:[%s1 + $0x78] sm:$0xff]
        %v215 = vld [vmem:[%s1 + $0x80] sm:$0xff]
        %v216 = vld [vmem:[%s1 + $0x88] sm:$0xff]
        %v217 = vld [vmem:[%s1 + $0x90] sm:$0xff]
        %v218 = vld [vmem:[%s1 + $0x98] sm:$0xff]
        %v219 = vld [vmem:[%s1 + $0xa0] sm:$0xff]
        %v220 = vld [vmem:[%s1 + $0xa8] sm:$0xff]
        %v221 = vld [vmem:[%s1 + $0xb0] sm:$0xff]
        %v222 = vld [vmem:[%s1 + $0xb8] sm:$0xff]
        %v223 = vld [vmem:[%s1 + $0xc0] sm:$0xff]
        %v224 = vld [vmem:[%s1 + $0xc8] sm:$0xff]
        %v225 = vld [vmem:[%s1 + $0xd0] sm:$0xff]
        %v226 = vld [vmem:[%s1 + $0xd8] sm:$0xff]
        %v227 = vld [vmem:[%s1 + $0xe0] sm:$0xff]
        %v228 = vld [vmem:[%s1 + $0xe8] sm:$0xff]
        %v229 = vld [vmem:[%s1 + $0xf0] sm:$0xff]
        %v230 = vld [vmem:[%s1 + $0xf8] sm:$0xff]
        %v231 = vld [vmem:[%s1 + $0x100] sm:$0xff]
        %v232 = vld [vmem:[%s1 + $0x108] sm:$0xff]
        %v233 = vld [vmem:[%s1 + $0x110] sm:$0xff]
        %v234 = vld [vmem:[%s1 + $0x118] sm:$0xff]
        %v235 = vld [vmem:[%s1 + $0x120] sm:$0xff]
        %v236 = vld [vmem:[%s1 + $0x128] sm:$0xff]
        %v237 = vld [vmem:[%s1 + $0x130] sm:$0xff]
        %v238 = vld [vmem:[%s1 + $0x138] sm:$0xff]
        %v239 = vld [vmem:[%s1 + $0x140] sm:$0xff]
        %v240 = vld [vmem:[%s1 + $0x148] sm:$0xff]
        %v241 = vld [vmem:[%s1 + $0x150] sm:$0xff]
        %v242 = vld [vmem:[%s1 + $0x158] sm:$0xff]
        %v243 = vld [vmem:[%s1 + $0x160] sm:$0xff]
        %v244 = vld [vmem:[%s1 + $0x168] sm:$0xff]
        %v245 = vld [vmem:[%s1 + $0x170] sm:$0xff]
        %v246 = vld [vmem:[%s1 + $0x178] sm:$0xff]
        %247 = vmatpush.msra.mxu0 %v214
        %248 = vmatpush.msra.mxu0 %v213
        %249 = vmatpush.msra.mxu0 %v212
        %250 = vmatpush.msra.mxu0 %v211
        %251 = vmatpush.msra.mxu0 %v210
        %252 = vmatpush.msra.mxu0 %v209
        %253 = vmatpush.msra.mxu0 %v208
        %254 = vmatpush.msra.mxu0 %v207
        %255 = vmatpush.msra.mxu0 %v206
        %256 = vmatpush.msra.mxu0 %v205
        %257 = vmatpush.msra.mxu0 %v204
        %258 = vmatpush.msra.mxu0 %v203
        %259 = vmatpush.msra.mxu0 %v202
        %260 = vmatpush.msra.mxu0 %v201
        %261 = vmatpush.msra.mxu0 %v200
        %262 = vmatpush.msra.mxu0 %v199
        %263 = vmatmul.f32.gmra.mxu0 %v196
        %v264 = vpop.f32.mrf.mxu0
        %v265 = vadd.f32 0.0, %v264
        %266 = vdwg.mxu0
        %267 = vmatpush.msra.mxu0 %v230
        %268 = vmatpush.msra.mxu0 %v229
        %269 = vmatpush.msra.mxu0 %v228
        %270 = vmatpush.msra.mxu0 %v227
        %271 = vmatpush.msra.mxu0 %v226
        %272 = vmatpush.msra.mxu0 %v225
        %273 = vmatpush.msra.mxu0 %v224
        %274 = vmatpush.msra.mxu0 %v223
        %275 = vmatpush.msra.mxu0 %v222
        %276 = vmatpush.msra.mxu0 %v221
        %277 = vmatpush.msra.mxu0 %v220
        %278 = vmatpush.msra.mxu0 %v219
        %279 = vmatpush.msra.mxu0 %v218
        %280 = vmatpush.msra.mxu0 %v217
        %281 = vmatpush.msra.mxu0 %v216
        %282 = vmatpush.msra.mxu0 %v215
        %283 = vmatmul.f32.gmra.mxu0 %v197
        %v284 = vpop.f32.mrf.mxu0
        %v285 = vadd.f32 %v265, %v284
        %286 = vdwg.mxu0
        %287 = vmatpush.msra.mxu0 %v246
        %288 = vmatpush.msra.mxu0 %v245
        %289 = vmatpush.msra.mxu0 %v244
        %290 = vmatpush.msra.mxu0 %v243
        %291 = vmatpush.msra.mxu0 %v242
        %292 = vmatpush.msra.mxu0 %v241
        %293 = vmatpush.msra.mxu0 %v240
        %294 = vmatpush.msra.mxu0 %v239
        %295 = vmatpush.msra.mxu0 %v238
        %296 = vmatpush.msra.mxu0 %v237
        %297 = vmatpush.msra.mxu0 %v236
        %298 = vmatpush.msra.mxu0 %v235
        %299 = vmatpush.msra.mxu0 %v234
        %300 = vmatpush.msra.mxu0 %v233
        %301 = vmatpush.msra.mxu0 %v232
        %302 = vmatpush.msra.mxu0 %v231
        %303 = vmatmul.f32.gmra.mxu0 %v198
        %v304 = vpop.f32.mrf.mxu0
        %v305 = vadd.f32 %v285, %v304
        %306 = vdwg.mxu0
        %v307 = vld [vmem:[%s2] sm:$0xff]
        %v308 = vld [vmem:[%s2 + $0x8] sm:$0xff]
        %v309 = vld [vmem:[%s2 + $0x10] sm:$0xff]
        %v310 = vld [vmem:[%s2 + $0x18] sm:$0xff]
        %v311 = vld [vmem:[%s2 + $0x20] sm:$0xff]
        %v312 = vld [vmem:[%s2 + $0x28] sm:$0xff]
        %v313 = vld [vmem:[%s2 + $0x30] sm:$0xff]
        %v314 = vld [vmem:[%s2 + $0x38] sm:$0xff]
        %v315 = vld [vmem:[%s2 + $0x40] sm:$0xff]
        %v316 = vld [vmem:[%s2 + $0x48] sm:$0xff]
        %v317 = vld [vmem:[%s2 + $0x50] sm:$0xff]
        %v318 = vld [vmem:[%s2 + $0x58] sm:$0xff]
        %v319 = vld [vmem:[%s2 + $0x60] sm:$0xff]
        %v320 = vld [vmem:[%s2 + $0x68] sm:$0xff]
        %v321 = vld [vmem:[%s2 + $0x70] sm:$0xff]
        %v322 = vld [vmem:[%s2 + $0x78] sm:$0xff]
        %v323 = vld [vmem:[%s2 + $0x80] sm:$0xff]
        %v324 = vld [vmem:[%s2 + $0x88] sm:$0xff]
        %v325 = vld [vmem:[%s2 + $0x90] sm:$0xff]
        %v326 = vld [vmem:[%s2 + $0x98] sm:$0xff]
        %v327 = vld [vmem:[%s2 + $0xa0] sm:$0xff]
        %v328 = vld [vmem:[%s2 + $0xa8] sm:$0xff]
        %v329 = vld [vmem:[%s2 + $0xb0] sm:$0xff]
        %v330 = vld [vmem:[%s2 + $0xb8] sm:$0xff]
        %v331 = vld [vmem:[%s2 + $0xc0] sm:$0xff]
        %v332 = vld [vmem:[%s2 + $0xc8] sm:$0xff]
        %v333 = vld [vmem:[%s2 + $0xd0] sm:$0xff]
        %v334 = vld [vmem:[%s2 + $0xd8] sm:$0xff]
        %v335 = vld [vmem:[%s2 + $0xe0] sm:$0xff]
        %v336 = vld [vmem:[%s2 + $0xe8] sm:$0xff]
        %v337 = vld [vmem:[%s2 + $0xf0] sm:$0xff]
        %v338 = vld [vmem:[%s2 + $0xf8] sm:$0xff]
        %v339 = vld [vmem:[%s2 + $0x100] sm:$0xff]
        %v340 = vld [vmem:[%s2 + $0x108] sm:$0xff]
        %v341 = vld [vmem:[%s2 + $0x110] sm:$0xff]
        %v342 = vld [vmem:[%s2 + $0x118] sm:$0xff]
        %v343 = vld [vmem:[%s2 + $0x120] sm:$0xff]
        %v344 = vld [vmem:[%s2 + $0x128] sm:$0xff]
        %v345 = vld [vmem:[%s2 + $0x130] sm:$0xff]
        %v346 = vld [vmem:[%s2 + $0x138] sm:$0xff]
        %v347 = vld [vmem:[%s2 + $0x140] sm:$0xff]
        %v348 = vld [vmem:[%s2 + $0x148] sm:$0xff]
        %v349 = vld [vmem:[%s2 + $0x150] sm:$0xff]
        %v350 = vld [vmem:[%s2 + $0x158] sm:$0xff]
        %v351 = vld [vmem:[%s2 + $0x160] sm:$0xff]
        %v352 = vld [vmem:[%s2 + $0x168] sm:$0xff]
        %v353 = vld [vmem:[%s2 + $0x170] sm:$0xff]
        %v354 = vld [vmem:[%s2 + $0x178] sm:$0xff]
        %355 = vmatpush.msra.mxu0 %v322
        %356 = vmatpush.msra.mxu0 %v321
        %357 = vmatpush.msra.mxu0 %v320
        %358 = vmatpush.msra.mxu0 %v319
        %359 = vmatpush.msra.mxu0 %v318
        %360 = vmatpush.msra.mxu0 %v317
        %361 = vmatpush.msra.mxu0 %v316
        %362 = vmatpush.msra.mxu0 %v315
        %363 = vmatpush.msra.mxu0 %v314
        %364 = vmatpush.msra.mxu0 %v313
        %365 = vmatpush.msra.mxu0 %v312
        %366 = vmatpush.msra.mxu0 %v311
        %367 = vmatpush.msra.mxu0 %v310
        %368 = vmatpush.msra.mxu0 %v309
        %369 = vmatpush.msra.mxu0 %v308
        %370 = vmatpush.msra.mxu0 %v307
        %371 = vmatmul.f32.gmra.mxu0 %v196
        %v372 = vpop.f32.mrf.mxu0
        %v373 = vadd.f32 0.0, %v372
        %374 = vdwg.mxu0
        %375 = vmatpush.msra.mxu0 %v338
        %376 = vmatpush.msra.mxu0 %v337
        %377 = vmatpush.msra.mxu0 %v336
        %378 = vmatpush.msra.mxu0 %v335
        %379 = vmatpush.msra.mxu0 %v334
        %380 = vmatpush.msra.mxu0 %v333
        %381 = vmatpush.msra.mxu0 %v332
        %382 = vmatpush.msra.mxu0 %v331
        %383 = vmatpush.msra.mxu0 %v330
        %384 = vmatpush.msra.mxu0 %v329
        %385 = vmatpush.msra.mxu0 %v328
        %386 = vmatpush.msra.mxu0 %v327
        %387 = vmatpush.msra.mxu0 %v326
        %388 = vmatpush.msra.mxu0 %v325
        %389 = vmatpush.msra.mxu0 %v324
        %390 = vmatpush.msra.mxu0 %v323
        %391 = vmatmul.f32.gmra.mxu0 %v197
        %v392 = vpop.f32.mrf.mxu0
        %v393 = vadd.f32 %v373, %v392
        %394 = vdwg.mxu0
        %395 = vmatpush.msra.mxu0 %v354
        %396 = vmatpush.msra.mxu0 %v353
        %397 = vmatpush.msra.mxu0 %v352
        %398 = vmatpush.msra.mxu0 %v351
        %399 = vmatpush.msra.mxu0 %v350
        %400 = vmatpush.msra.mxu0 %v349
        %401 = vmatpush.msra.mxu0 %v348
        %402 = vmatpush.msra.mxu0 %v347
        %403 = vmatpush.msra.mxu0 %v346
        %404 = vmatpush.msra.mxu0 %v345
        %405 = vmatpush.msra.mxu0 %v344
        %406 = vmatpush.msra.mxu0 %v343
        %407 = vmatpush.msra.mxu0 %v342
        %408 = vmatpush.msra.mxu0 %v341
        %409 = vmatpush.msra.mxu0 %v340
        %410 = vmatpush.msra.mxu0 %v339
        %411 = vmatmul.f32.gmra.mxu0 %v198
        %v412 = vpop.f32.mrf.mxu0
        %v413 = vadd.f32 %v393, %v412
        %414 = vdwg.mxu0
        %v415 = vld [vmem:[%s3] sm:$0xff]
        %v416 = vld [vmem:[%s3 + $0x8] sm:$0xff]
        %v417 = vld [vmem:[%s3 + $0x10] sm:$0xff]
        %v418 = vld [vmem:[%s3 + $0x18] sm:$0xff]
        %v419 = vld [vmem:[%s3 + $0x20] sm:$0xff]
        %v420 = vld [vmem:[%s3 + $0x28] sm:$0xff]
        %v421 = vld [vmem:[%s3 + $0x30] sm:$0xff]
        %v422 = vld [vmem:[%s3 + $0x38] sm:$0xff]
        %v423 = vld [vmem:[%s3 + $0x40] sm:$0xff]
        %v424 = vld [vmem:[%s3 + $0x48] sm:$0xff]
        %v425 = vld [vmem:[%s3 + $0x50] sm:$0xff]
        %v426 = vld [vmem:[%s3 + $0x58] sm:$0xff]
        %v427 = vld [vmem:[%s3 + $0x60] sm:$0xff]
        %v428 = vld [vmem:[%s3 + $0x68] sm:$0xff]
        %v429 = vld [vmem:[%s3 + $0x70] sm:$0xff]
        %v430 = vld [vmem:[%s3 + $0x78] sm:$0xff]
        %v431 = vld [vmem:[%s3 + $0x80] sm:$0xff]
        %v432 = vld [vmem:[%s3 + $0x88] sm:$0xff]
        %v433 = vld [vmem:[%s3 + $0x90] sm:$0xff]
        %v434 = vld [vmem:[%s3 + $0x98] sm:$0xff]
        %v435 = vld [vmem:[%s3 + $0xa0] sm:$0xff]
        %v436 = vld [vmem:[%s3 + $0xa8] sm:$0xff]
        %v437 = vld [vmem:[%s3 + $0xb0] sm:$0xff]
        %v438 = vld [vmem:[%s3 + $0xb8] sm:$0xff]
        %v439 = vld [vmem:[%s3 + $0xc0] sm:$0xff]
        %v440 = vld [vmem:[%s3 + $0xc8] sm:$0xff]
        %v441 = vld [vmem:[%s3 + $0xd0] sm:$0xff]
        %v442 = vld [vmem:[%s3 + $0xd8] sm:$0xff]
        %v443 = vld [vmem:[%s3 + $0xe0] sm:$0xff]
        %v444 = vld [vmem:[%s3 + $0xe8] sm:$0xff]
        %v445 = vld [vmem:[%s3 + $0xf0] sm:$0xff]
        %v446 = vld [vmem:[%s3 + $0xf8] sm:$0xff]
        %v447 = vld [vmem:[%s3 + $0x100] sm:$0xff]
        %v448 = vld [vmem:[%s3 + $0x108] sm:$0xff]
        %v449 = vld [vmem:[%s3 + $0x110] sm:$0xff]
        %v450 = vld [vmem:[%s3 + $0x118] sm:$0xff]
        %v451 = vld [vmem:[%s3 + $0x120] sm:$0xff]
        %v452 = vld [vmem:[%s3 + $0x128] sm:$0xff]
        %v453 = vld [vmem:[%s3 + $0x130] sm:$0xff]
        %v454 = vld [vmem:[%s3 + $0x138] sm:$0xff]
        %v455 = vld [vmem:[%s3 + $0x140] sm:$0xff]
        %v456 = vld [vmem:[%s3 + $0x148] sm:$0xff]
        %v457 = vld [vmem:[%s3 + $0x150] sm:$0xff]
        %v458 = vld [vmem:[%s3 + $0x158] sm:$0xff]
        %v459 = vld [vmem:[%s3 + $0x160] sm:$0xff]
        %v460 = vld [vmem:[%s3 + $0x168] sm:$0xff]
        %v461 = vld [vmem:[%s3 + $0x170] sm:$0xff]
        %v462 = vld [vmem:[%s3 + $0x178] sm:$0xff]
        %463 = vmatpush.msra.mxu0 %v430
        %464 = vmatpush.msra.mxu0 %v429
        %465 = vmatpush.msra.mxu0 %v428
        %466 = vmatpush.msra.mxu0 %v427
        %467 = vmatpush.msra.mxu0 %v426
        %468 = vmatpush.msra.mxu0 %v425
        %469 = vmatpush.msra.mxu0 %v424
        %470 = vmatpush.msra.mxu0 %v423
        %471 = vmatpush.msra.mxu0 %v422
        %472 = vmatpush.msra.mxu0 %v421
        %473 = vmatpush.msra.mxu0 %v420
        %474 = vmatpush.msra.mxu0 %v419
        %475 = vmatpush.msra.mxu0 %v418
        %476 = vmatpush.msra.mxu0 %v417
        %477 = vmatpush.msra.mxu0 %v416
        %478 = vmatpush.msra.mxu0 %v415
        %479 = vmatmul.f32.gmra.mxu0 %v196
        %v480 = vpop.f32.mrf.mxu0
        %v481 = vadd.f32 0.0, %v480
        %482 = vdwg.mxu0
        %483 = vmatpush.msra.mxu0 %v446
        %484 = vmatpush.msra.mxu0 %v445
        %485 = vmatpush.msra.mxu0 %v444
        %486 = vmatpush.msra.mxu0 %v443
        %487 = vmatpush.msra.mxu0 %v442
        %488 = vmatpush.msra.mxu0 %v441
        %489 = vmatpush.msra.mxu0 %v440
        %490 = vmatpush.msra.mxu0 %v439
        %491 = vmatpush.msra.mxu0 %v438
        %492 = vmatpush.msra.mxu0 %v437
        %493 = vmatpush.msra.mxu0 %v436
        %494 = vmatpush.msra.mxu0 %v435
        %495 = vmatpush.msra.mxu0 %v434
        %496 = vmatpush.msra.mxu0 %v433
        %497 = vmatpush.msra.mxu0 %v432
        %498 = vmatpush.msra.mxu0 %v431
        %499 = vmatmul.f32.gmra.mxu0 %v197
        %v500 = vpop.f32.mrf.mxu0
        %v501 = vadd.f32 %v481, %v500
        %502 = vdwg.mxu0
        %503 = vmatpush.msra.mxu0 %v462
        %504 = vmatpush.msra.mxu0 %v461
        %505 = vmatpush.msra.mxu0 %v460
        %506 = vmatpush.msra.mxu0 %v459
        %507 = vmatpush.msra.mxu0 %v458
        %508 = vmatpush.msra.mxu0 %v457
        %509 = vmatpush.msra.mxu0 %v456
        %510 = vmatpush.msra.mxu0 %v455
        %511 = vmatpush.msra.mxu0 %v454
        %512 = vmatpush.msra.mxu0 %v453
        %513 = vmatpush.msra.mxu0 %v452
        %514 = vmatpush.msra.mxu0 %v451
        %515 = vmatpush.msra.mxu0 %v450
        %516 = vmatpush.msra.mxu0 %v449
        %517 = vmatpush.msra.mxu0 %v448
        %518 = vmatpush.msra.mxu0 %v447
        %519 = vmatmul.f32.gmra.mxu0 %v198
        %v520 = vpop.f32.mrf.mxu0
        %v521 = vadd.f32 %v501, %v520
        %522 = vdwg.mxu0
        %vm523 = vcmask 130048
        %v525 = vsel %vm523, %v305, 0
        %v528 = vsel %vm523, %v413, 0
        %530 = vmatpush.xpose.msra.mxu0 0.0
        %531 = vmatpush.xpose.msra.mxu0 0.0
        %532 = vmatpush.xpose.msra.mxu0 0.0
        %533 = vmatpush.xpose.msra.mxu0 0.0
        %534 = vmatpush.xpose.msra.mxu0 0.0
        %535 = vmatpush.xpose.msra.mxu0 0.0
        %536 = vmatpush.xpose.msra.mxu0 0.0
        %537 = vmatpush.xpose.msra.mxu0 0.0
        %538 = vmatpush.xpose.msra.mxu0 0.0
        %539 = vmatpush.xpose.msra.mxu0 0.0
        %540 = vmatpush.xpose.msra.mxu0 0.0
        %541 = vmatpush.xpose.msra.mxu0 0.0
        %542 = vmatpush.xpose.msra.mxu0 0.0
        %543 = vmatpush.xpose.msra.mxu0 0.0
        %544 = vmatpush.xpose.msra.mxu0 0.0
        %545 = vmatpush.xpose.msra.mxu0 %v528
        %546 = vmatmul.f32.gmra.mxu0 %v525
        %v547 = vpop.f32.mrf.mxu0
        %v548 = vadd.f32 0.0, %v547
        %549 = vdwg.mxu0
        %v550 = vmul.f32 %v548, 0.05103104
        %v551 = vlaneseq
        %v552 = vshrl.u32 %v551, 7
        %v553 = vlaneseq
        %v554 = vand.u32 %v553, 127
        %vm555 = vcmp.ge.s32.totalorder %v552, %v554
        %v556 = vsel %vm555, %v550, -inf
        %vm557 = vcmask 64512
        %v558 = vsel %vm557, %v556, -inf
        %559 = vmax.xlane.f32.xlu0 %v558
        %v560 = vpop.xlane.xlu0 %559
        %v561 = vsub.f32 %v556, %v560
        %v562 = vmul.f32 %v561, 1.442695
        %v563 = vpow.pop %v562
        %v564 = vsel %vm557, %v563, 0.0
        %565 = vadd.xlane.f32.xlu0 %v564
        %v566 = vpop.xlane.xlu0 %565
        %v567 = vrcp.pop %v566
        %v568 = vmul.f32 %v566, %v567
        %v569 = vsub.f32 1.0, %v568
        %v570 = vmul.f32 %v567, %v569
        %v571 = vadd.f32 %v567, %v570
        %vm572 = vweird.f32 %v566
        %vm573 = vweird.f32 %v567
        %vm574 = vmor %vm572, %vm573
        %v575 = vsel %vm574, %v567, %v571
        %v576 = vand.u32 2147483647, %v566
        %vm577 = vcmp.eq.f32.partialorder %v576, 8.507059e+37
        %v578 = vand.u32 %v566, 2147483648
        %v579 = vor.u32 1.1754944e-38, %v578
        %v580 = vsel %vm577, %v579, %v575
        %v581 = vmul.f32 %v563, %v580
        %v583 = vsel %vm557, %v581, 0
        %585 = vmatpush.msra.mxu0 0.0
        %586 = vmatpush.msra.mxu0 0.0
        %587 = vmatpush.msra.mxu0 0.0
        %588 = vmatpush.msra.mxu0 0.0
        %589 = vmatpush.msra.mxu0 0.0
        %590 = vmatpush.msra.mxu0 0.0
        %591 = vmatpush.msra.mxu0 0.0
        %592 = vmatpush.msra.mxu0 0.0
        %593 = vmatpush.msra.mxu0 0.0
        %594 = vmatpush.msra.mxu0 0.0
        %595 = vmatpush.msra.mxu0 0.0
        %596 = vmatpush.msra.mxu0 0.0
        %597 = vmatpush.msra.mxu0 0.0
        %598 = vmatpush.msra.mxu0 0.0
        %599 = vmatpush.msra.mxu0 0.0
        %600 = vmatpush.msra.mxu0 %v521
        %601 = vmatmul.f32.gmra.mxu0 %v583
        %v602 = vpop.f32.mrf.mxu0
        %v603 = vadd.f32 0.0, %v602
        %604 = vdwg.mxu0
        %605 = vst.msk [vmem:[%s190] sm:$0xff] %vm523, %v603
        %s606 = sand.u32 %s115, 1
        %s607 = scalar_lea.sflag [#allocation3], %s606
        %s608 = sand.u32 %s115, 1
        %s609 = smul.addr %s608, 8
        %s610 = scalar_lea.vmem [#allocation2], %s609
        // Predicated region
        $region37: #{tpu_custom_call.1} parent=35 // pred_check
          %p611 = pneg %p125
        $region38: #{tpu_custom_call.1} parent=35 // pred_check_branch
          %613 = sbr.rel (%p611) target = $region40
        $region39: #{tpu_custom_call.1} parent=35 // pred_region
          %615 = vsyncadd %s607, 0
          %s616 = smul.addr %s18, 8
          %s617 = scalar_lea.hbm %s4, %s616
          %s619 = sshll.u32 %s610, 4
          %s620 = int_to_ptr.vmem [resolvable:$true] %s619
          %s621 = sshll.u32 %s617, 4
          %s622 = int_to_ptr.hbm [resolvable:$true] %s621
          %624 = dma.vmem_to_hbm [thread:$0]  %s620, 128, %s622, %s607
        $region40: #{tpu_custom_call.1} parent=35 // pred_fallthru
          _
      $region36: #{tpu_custom_call.1} parent=5 // pred_fallthru
        _
      %p625 = scmp.le.s32.totalorder 2, %s13
      // Predicated region
      $region41: #{tpu_custom_call.1} parent=5 // pred_check
        %p626 = pneg %p625
      $region42: #{tpu_custom_call.1} parent=5 // pred_check_branch
        %628 = sbr.rel (%p626) target = $region44
      $region43: #{tpu_custom_call.1} parent=5 // pred_region
        %s629 = ssub.s32 %s13, 2
        // Predicated region
        $region45: #{tpu_custom_call.1} parent=43 // pred_check
          %p630 = pneg %p131
        $region46: #{tpu_custom_call.1} parent=43 // pred_check_branch
          %632 = sbr.rel (%p630) target = $region48
        $region47: #{tpu_custom_call.1} parent=43 // pred_region
          %s633 = sand.u32 %s116, 1
          %s634 = scalar_lea.sflag [#allocation3], %s633
          %s635 = sand.u32 %s116, 1
          %s636 = smul.addr %s635, 8
          %s637 = scalar_lea.vmem [#allocation2], %s636
          %639 = dma.done %s634, 128
        $region48: #{tpu_custom_call.1} parent=43 // pred_fallthru
          _
      $region44: #{tpu_custom_call.1} parent=5 // pred_fallthru
        _
    $region6: #{tpu_custom_call.1} parent=1 // loop_footer
      %s17 = sadd.s32 1, %s13
    $region7: #{tpu_custom_call.1} parent=1 // loop_footer_branch
      %12 = sbr.rel target = $region3
    $region8: #{tpu_custom_call.1} parent=1 // loop_exit
      _
    %640 = vsyncpa [#allocation3], 1
    %s641 = scalar_lea.sflag [#allocation3], 1
    %642 = vsyncpa %s641, 1

</llo_original>
